<compile_context>
chip_gen: v7x
topology: tpu7x:2x2x1
jax: 0.10.0
libtpu: 0.0.40
codegen_flags: <defaults>
</compile_context>

<pallas_src>
import functools

import jax
import jax.numpy as jnp
from jax.experimental import pallas as pl
from jax.experimental.pallas import tpu as pltpu


def _round_up(x, m):
    return ((x + m - 1) // m) * m


def _cdiv(a, b):
    return -(-a // b)


_VMEM_CAP_BYTES = 56 * 1024 * 1024  # conservative: v7x has 64 MiB physical VMEM


def _invariant_spec(shape):
    """BlockSpec for a grid-invariant (VMEM-resident) operand, single-buffered."""
    index_map = lambda i: (0,) * len(shape)
    try:
        return pl.BlockSpec(shape, index_map, pipeline_mode=pl.Buffered(1))
    except TypeError:
        # Older jax without pipeline_mode support: fall back to default buffering.
        return pl.BlockSpec(shape, index_map)


def _vmem_needed_bytes(tm, f_in, fl_pad, padded_ws, padded_bs):
    w_bytes = sum(w.size * 2 for w in padded_ws)      # bf16 weights, single-buffered
    b_bytes = sum(b.size * 4 for b in padded_bs)      # f32 biases,  single-buffered
    x_bytes = 2 * tm * f_in * 4                       # double-buffered f32 input tiles
    o_bytes = 2 * tm * fl_pad * 4                     # double-buffered f32 output tiles
    max_m = max(w.shape[1] for w in padded_ws)
    act_bytes = 2 * tm * max_m * (4 + 2)              # f32 acc + bf16 h, with headroom
    return w_bytes + b_bytes + x_bytes + o_bytes + act_bytes


# ----------------------------------------------------------------------------
# Pallas kernel: fused multi-layer Linear (+ ReLU between layers)
# ----------------------------------------------------------------------------
def _mlp_kernel(*refs, num_layers):
    # refs = (x_ref, w0, b0, w1, b1, ..., w_{L-1}, b_{L-1}, o_ref)
    x_ref = refs[0]
    o_ref = refs[-1]

    h = x_ref[...].astype(jnp.bfloat16)               # cast f32 -> bf16 in-kernel
    for layer in range(num_layers):
        w = refs[1 + 2 * layer][...]                  # (K, M_pad) bf16, VMEM-resident
        b = refs[2 + 2 * layer][...]                  # (1, M_pad) f32
        acc = jnp.dot(h, w, preferred_element_type=jnp.float32) + b
        if layer < num_layers - 1:
            h = jnp.maximum(acc, 0.0).astype(jnp.bfloat16)   # ReLU on f32 accumulator
        else:
            o_ref[...] = acc.astype(o_ref.dtype)


# ----------------------------------------------------------------------------
# Fused forward pass (jitted: pallas_call + output column slice)
# ----------------------------------------------------------------------------
@functools.partial(jax.jit, static_argnames=("out_feats", "out_dtype"))
def pallas_mlp(x, padded_ws, padded_bs, out_feats, out_dtype=jnp.float32):
    """x: (N, in_feats) f32.  Returns (N, out_feats) out_dtype."""
    N, F_in = x.shape
    FL = padded_ws[-1].shape[1]                       # lane-padded output feature dim
    num_layers = len(padded_ws)

    # ---- row tiling ---------------------------------------------------------
    # Aim for >= 2 row tiles (v7x has 2 TensorCores and "parallel" sharding
    # needs >= 2 grid steps); use 256-row granules for big batches so LHS tiles
    # match the 256x256 MXU on v6e/v7x, cap at 1024 rows (~0.5-1 MB input tiles
    # hit the HBM roofline while keeping VMEM small).
    n_tiles_target = 2 if N >= 64 else 1
    granule = 256 if N >= 512 else 8
    tm = min(1024, _round_up(_cdiv(N, n_tiles_target), granule))
    while tm > 256 and _vmem_needed_bytes(tm, F_in, FL, padded_ws, padded_bs) > _VMEM_CAP_BYTES:
        tm //= 2
    # TODO(synk): if the resident padded weights alone exceed the VMEM cap
    # (very large hidden sizes on v7x), fall back to tiling the hidden/K axis
    # with an f32 VMEM accumulator (or per-layer pallas_calls).
    grid = (_cdiv(N, tm),)

    # ---- specs --------------------------------------------------------------
    in_specs = [pl.BlockSpec((tm, F_in), lambda i: (i, 0))]   # streaming f32 x tiles
    flat_params = []
    for w, b in zip(padded_ws, padded_bs):
        K, M = w.shape
        in_specs.append(_invariant_spec((K, M)))              # bf16 weight, resident
        in_specs.append(_invariant_spec((1, M)))              # f32 bias,  resident
        flat_params.extend([w, b])
    out_spec = pl.BlockSpec((tm, FL), lambda i: (i, 0))       # lane-dense output tiles

    # ---- VMEM budget / cost estimate ----------------------------------------
    need = _vmem_needed_bytes(tm, F_in, FL, padded_ws, padded_bs)
    vmem_limit = int(min(_VMEM_CAP_BYTES, max(2 * need, 16 * 1024 * 1024)))

    flops = 2 * N * sum(w.shape[0] * w.shape[1] for w in padded_ws)
    bytes_accessed = (
        N * F_in * 4
        + sum(w.size * 2 for w in padded_ws)
        + sum(b.size * 4 for b in padded_bs)
        + N * FL * jnp.dtype(out_dtype).itemsize
    )

    y_pad = pl.pallas_call(
        functools.partial(_mlp_kernel, num_layers=num_layers),
        out_shape=jax.ShapeDtypeStruct((N, FL), out_dtype),
        grid=grid,
        in_specs=in_specs,
        out_specs=out_spec,
        compiler_params=pltpu.CompilerParams(
            dimension_semantics=("parallel",),        # shard row tiles across TCs
            vmem_limit_bytes=vmem_limit,
        ),
        cost_estimate=pl.CostEstimate(
            flops=flops, transcendentals=0, bytes_accessed=bytes_accessed
        ),
    )(x, *flat_params)

    # Column slice fuses into the same jit; rows are already exact (no row pad).
    return y_pad[:, :out_feats]


# ----------------------------------------------------------------------------
# MLP module (parameters built deterministically in-script, PyTorch-style init)
# ----------------------------------------------------------------------------
class MLP:
    def __init__(self, in_feats, out_feats, hidden_size, num_layers,
                 dropout=0.0, activation="relu", norm=None, act_first=False,
                 bias=True, key=jax.random.PRNGKey(42)):
        assert activation == "relu", "only relu is implemented here"
        assert norm is None, "norm path not wired into this synthetic kernel"
        # TODO(synk): layernorm / batchnorm hidden-layer variants not implemented.
        self.dropout = dropout
        self.act_first = act_first
        self.out_feats = out_feats
        shapes = [in_feats] + [hidden_size] * (num_layers - 1) + [out_feats]

        # f32 reference parameters (weights stored pre-transposed: (in, out)).
        self.params = []
        for layer in range(num_layers):
            fan_in, fan_out = shapes[layer], shapes[layer + 1]
            key, kw, kb = jax.random.split(key, 3)
            bound = 1.0 / (fan_in ** 0.5)  # matches torch.nn.Linear.reset_parameters
            w = jax.random.uniform(kw, (fan_in, fan_out), jnp.float32, -bound, bound)
            if bias:
                b = jax.random.uniform(kb, (fan_out,), jnp.float32, -bound, bound)
            else:
                b = jnp.zeros((fan_out,), jnp.float32)
            self.params.append((w, b))

        # Lane-dense bf16 copies for the kernel.  Only OUTPUT feature dims are
        # padded to 128; the first layer's K dim stays at in_feats so raw f32 x
        # can be fed straight into the kernel with no host-side padding.
        f_pads = [in_feats] + [_round_up(f, 128) for f in shapes[1:]]
        padded_ws, padded_bs = [], []
        for layer, (w, b) in enumerate(self.params):
            kp, mp = f_pads[layer], f_pads[layer + 1]
            wp = jnp.zeros((kp, mp), jnp.bfloat16)
            wp = wp.at[: w.shape[0], : w.shape[1]].set(w.astype(jnp.bfloat16))
            bp = jnp.zeros((1, mp), jnp.float32)
            bp = bp.at[0, : b.shape[0]].set(b)
            padded_ws.append(wp)
            padded_bs.append(bp)
        self.padded_ws = tuple(padded_ws)
        self.padded_bs = tuple(padded_bs)

    def __call__(self, x):
        # dropout with p=0.0 is the identity (default config).
        # TODO(synk): training-mode dropout with p > 0 (needs in-kernel PRNG).
        return pallas_mlp(x, self.padded_ws, self.padded_bs,
                          out_feats=self.out_feats)


# ----------------------------------------------------------------------------
# Pure-JAX references for correctness checking
# ----------------------------------------------------------------------------
def mlp_reference_f32(params, x):
    for (w, b) in params[:-1]:
        x = jnp.maximum(x @ w + b, 0.0)
    w, b = params[-1]
    return x @ w + b


def mlp_reference_bf16(params, x):
    # Mimics the kernel's bf16-operand / f32-accumulation numerics.
    h = x.astype(jnp.bfloat16)
    for (w, b) in params[:-1]:
        y = jnp.dot(h, w.astype(jnp.bfloat16), preferred_element_type=jnp.float32) + b
        h = jnp.maximum(y, 0.0).astype(jnp.bfloat16)
    w, b = params[-1]
    return jnp.dot(h, w.astype(jnp.bfloat16), preferred_element_type=jnp.float32) + b


if __name__ == "__main__":
    N, in_feats, hidden, out_feats, num_layers = 8, 32, 32, 16, 3

    model = MLP(in_feats, out_feats, hidden, num_layers)

    x = jax.random.normal(jax.random.PRNGKey(0), (N, in_feats), jnp.float32)

    y = model(x)
    y = jax.block_until_ready(y)
    assert y.shape == (N, out_feats)
    assert y.dtype == jnp.float32

    # Tight check against a reference with matching bf16/f32 numerics.
    y_bf16_ref = mlp_reference_bf16(model.params, x)
    assert jnp.allclose(y, y_bf16_ref, atol=2e-3, rtol=2e-3)

    # Loose check against the full-f32 reference (bf16 operand quantization is
    # an explicit fidelity trade-off vs the PyTorch f32 module).
    y_f32_ref = mlp_reference_f32(model.params, x)
    assert jnp.allclose(y, y_f32_ref, atol=5e-2, rtol=5e-2)

    print("KERNEL_OK")
</pallas_src>

<mosaic_0001>
module attributes {stable_mosaic.version = 11 : i64} {
  func.func @_mlp_kernel(%arg0: i32, %arg1: memref<8x32xf32, #tpu.memory_space<vmem>>, %arg2: memref<32x128xbf16, #tpu.memory_space<vmem>>, %arg3: memref<1x128xf32, #tpu.memory_space<vmem>>, %arg4: memref<128x128xbf16, #tpu.memory_space<vmem>>, %arg5: memref<1x128xf32, #tpu.memory_space<vmem>>, %arg6: memref<128x128xbf16, #tpu.memory_space<vmem>>, %arg7: memref<1x128xf32, #tpu.memory_space<vmem>>, %arg8: memref<8x128xf32, #tpu.memory_space<vmem>>) attributes {dimension_semantics = [#tpu.dimension_semantics<parallel>], iteration_bounds = array<i64: 1>, scalar_prefetch = 0 : i64, scratch_operands = 0 : i64, tpu.core_type = #tpu.core_type<tc>, window_params = [{transform_indices = @transform_0, window_bounds = array<i64: 8, 32>}, {pipeline_mode = #tpu.pipeline_mode<synchronous>, transform_indices = @transform_1, window_bounds = array<i64: 32, 128>}, {pipeline_mode = #tpu.pipeline_mode<synchronous>, transform_indices = @transform_2, window_bounds = array<i64: 1, 128>}, {pipeline_mode = #tpu.pipeline_mode<synchronous>, transform_indices = @transform_3, window_bounds = array<i64: 128, 128>}, {pipeline_mode = #tpu.pipeline_mode<synchronous>, transform_indices = @transform_4, window_bounds = array<i64: 1, 128>}, {pipeline_mode = #tpu.pipeline_mode<synchronous>, transform_indices = @transform_5, window_bounds = array<i64: 128, 128>}, {pipeline_mode = #tpu.pipeline_mode<synchronous>, transform_indices = @transform_6, window_bounds = array<i64: 1, 128>}, {transform_indices = @transform_7, window_bounds = array<i64: 8, 128>}]} {
    %c0 = arith.constant 0 : index
    %c0_0 = arith.constant 0 : index
    %0 = vector.load %arg1[%c0, %c0_0] : memref<8x32xf32, #tpu.memory_space<vmem>>, vector<8x32xf32>
    %1 = arith.truncf %0 : vector<8x32xf32> to vector<8x32xbf16>
    %c0_1 = arith.constant 0 : index
    %c0_2 = arith.constant 0 : index
    %2 = vector.load %arg2[%c0_1, %c0_2] : memref<32x128xbf16, #tpu.memory_space<vmem>>, vector<32x128xbf16>
    %c0_3 = arith.constant 0 : index
    %c0_4 = arith.constant 0 : index
    %3 = vector.load %arg3[%c0_3, %c0_4] : memref<1x128xf32, #tpu.memory_space<vmem>>, vector<1x128xf32>
    %cst = arith.constant dense<0.000000e+00> : vector<8x128xf32>
    %4 = tpu.matmul %1, %2, %cst {dimension_numbers = #tpu.dot_dimension_numbers<[1], [0], [0], [1], [0, 0, 1, 1], [], []>} : vector<8x32xbf16>, vector<32x128xbf16>, vector<8x128xf32> -> vector<8x128xf32>
    %5 = vector.broadcast %3 : vector<1x128xf32> to vector<8x128xf32>
    %6 = arith.addf %4, %5 : vector<8x128xf32>
    %cst_5 = arith.constant 0.000000e+00 : f32
    %7 = vector.broadcast %cst_5 : f32 to vector<8x128xf32>
    %8 = arith.maximumf %6, %7 : vector<8x128xf32>
    %9 = arith.truncf %8 : vector<8x128xf32> to vector<8x128xbf16>
    %c0_6 = arith.constant 0 : index
    %c0_7 = arith.constant 0 : index
    %10 = vector.load %arg4[%c0_6, %c0_7] : memref<128x128xbf16, #tpu.memory_space<vmem>>, vector<128x128xbf16>
    %c0_8 = arith.constant 0 : index
    %c0_9 = arith.constant 0 : index
    %11 = vector.load %arg5[%c0_8, %c0_9] : memref<1x128xf32, #tpu.memory_space<vmem>>, vector<1x128xf32>
    %cst_10 = arith.constant dense<0.000000e+00> : vector<8x128xf32>
    %12 = tpu.matmul %9, %10, %cst_10 {dimension_numbers = #tpu.dot_dimension_numbers<[1], [0], [0], [1], [0, 0, 1, 1], [], []>} : vector<8x128xbf16>, vector<128x128xbf16>, vector<8x128xf32> -> vector<8x128xf32>
    %13 = vector.broadcast %11 : vector<1x128xf32> to vector<8x128xf32>
    %14 = arith.addf %12, %13 : vector<8x128xf32>
    %cst_11 = arith.constant 0.000000e+00 : f32
    %15 = vector.broadcast %cst_11 : f32 to vector<8x128xf32>
    %16 = arith.maximumf %14, %15 : vector<8x128xf32>
    %17 = arith.truncf %16 : vector<8x128xf32> to vector<8x128xbf16>
    %c0_12 = arith.constant 0 : index
    %c0_13 = arith.constant 0 : index
    %18 = vector.load %arg6[%c0_12, %c0_13] : memref<128x128xbf16, #tpu.memory_space<vmem>>, vector<128x128xbf16>
    %c0_14 = arith.constant 0 : index
    %c0_15 = arith.constant 0 : index
    %19 = vector.load %arg7[%c0_14, %c0_15] : memref<1x128xf32, #tpu.memory_space<vmem>>, vector<1x128xf32>
    %cst_16 = arith.constant dense<0.000000e+00> : vector<8x128xf32>
    %20 = tpu.matmul %17, %18, %cst_16 {dimension_numbers = #tpu.dot_dimension_numbers<[1], [0], [0], [1], [0, 0, 1, 1], [], []>} : vector<8x128xbf16>, vector<128x128xbf16>, vector<8x128xf32> -> vector<8x128xf32>
    %21 = vector.broadcast %19 : vector<1x128xf32> to vector<8x128xf32>
    %22 = arith.addf %20, %21 : vector<8x128xf32>
    %c0_17 = arith.constant 0 : index
    %c0_18 = arith.constant 0 : index
    %23 = vector.load %arg8[%c0_17, %c0_18] : memref<8x128xf32, #tpu.memory_space<vmem>>, vector<8x128xf32>
    tpu.vector_store %arg8[%c0_17, %c0_18], %22 {strides = array<i32>} : memref<8x128xf32, #tpu.memory_space<vmem>>, vector<8x128xf32>,
    return
  }
  func.func @transform_0(%arg0: i32) -> (i32, i32) {
    %c0_i32 = arith.constant 0 : i32
    %c0_i32_0 = arith.constant 0 : i32
    return %arg0, %c0_i32 : i32, i32
  }
  func.func @transform_1(%arg0: i32) -> (i32, i32) {
    %c0_i32 = arith.constant 0 : i32
    %c0_i32_0 = arith.constant 0 : i32
    %c0_i32_1 = arith.constant 0 : i32
    return %c0_i32, %c0_i32_0 : i32, i32
  }
  func.func @transform_2(%arg0: i32) -> (i32, i32) {
    %c0_i32 = arith.constant 0 : i32
    %c0_i32_0 = arith.constant 0 : i32
    %c0_i32_1 = arith.constant 0 : i32
    return %c0_i32, %c0_i32_0 : i32, i32
  }
  func.func @transform_3(%arg0: i32) -> (i32, i32) {
    %c0_i32 = arith.constant 0 : i32
    %c0_i32_0 = arith.constant 0 : i32
    %c0_i32_1 = arith.constant 0 : i32
    return %c0_i32, %c0_i32_0 : i32, i32
  }
  func.func @transform_4(%arg0: i32) -> (i32, i32) {
    %c0_i32 = arith.constant 0 : i32
    %c0_i32_0 = arith.constant 0 : i32
    %c0_i32_1 = arith.constant 0 : i32
    return %c0_i32, %c0_i32_0 : i32, i32
  }
  func.func @transform_5(%arg0: i32) -> (i32, i32) {
    %c0_i32 = arith.constant 0 : i32
    %c0_i32_0 = arith.constant 0 : i32
    %c0_i32_1 = arith.constant 0 : i32
    return %c0_i32, %c0_i32_0 : i32, i32
  }
  func.func @transform_6(%arg0: i32) -> (i32, i32) {
    %c0_i32 = arith.constant 0 : i32
    %c0_i32_0 = arith.constant 0 : i32
    %c0_i32_1 = arith.constant 0 : i32
    return %c0_i32, %c0_i32_0 : i32, i32
  }
  func.func @transform_7(%arg0: i32) -> (i32, i32) {
    %c0_i32 = arith.constant 0 : i32
    %c0_i32_0 = arith.constant 0 : i32
    return %arg0, %c0_i32 : i32, i32
  }
}

</mosaic_0001>

<llo_original>
// kernel: pallas_mlp.1
$region0: #{pallas_mlp.1}
  #allocation0 [shape = 'u32[]', space=smem, size = 0x4, offset = 0x4, fixed_abs, tag = 'smem constant byte address 0x4 - core index']
  #allocation1 [shape = 'u32[144,128]{1,0:T(1,128)}', space=vmem, size = 0x12000, scoped, tag = 'internal scratch']
  %s0 = inlined_call_operand.hbm [shape: f32[8,32], index: 0, kind: input, shape index: {}]
  %s1 = inlined_call_operand.hbm [shape: bf16[32,128], index: 1, kind: input, shape index: {}]
  %s2 = inlined_call_operand.vmem [shape: f32[1,128], index: 2, kind: input, shape index: {}]
  %s3 = inlined_call_operand.hbm [shape: bf16[128,128], index: 3, kind: input, shape index: {}]
  %s4 = inlined_call_operand.vmem [shape: f32[1,128], index: 4, kind: input, shape index: {}]
  %s5 = inlined_call_operand.hbm [shape: bf16[128,128], index: 5, kind: input, shape index: {}]
  %s6 = inlined_call_operand.vmem [shape: f32[1,128], index: 6, kind: input, shape index: {}]
  %s7 = inlined_call_operand.hbm [shape: f32[8,128], index: 7, kind: output, shape index: {}]
  %s8 = sld [smem:[#allocation0]]
  $region54: #{pallas_mlp.1} parent=0
    _
  %s10 = ssub.s32 1, %s8
  %s11 = scalar_select 0, %s10, %s8
  $region1: #{pallas_mlp.1} parent=0
    #allocation2 [shape = 'u8[4096]{0}', space=vmem, size = 0x1000, scoped, tag = 'input window, operand 0, single buffered']
    #allocation3 [shape = 's32[1]{0}', space=sflag, size = 0x4, scoped, tag = 'scoped memory for pallas_mlp.1']
    #allocation4 [shape = 's32[1]{0}', space=sflag, size = 0x4, scoped, tag = 'scoped memory for pallas_mlp.1']
    #allocation5 [shape = 'u8[8192]{0}', space=vmem, size = 0x2000, scoped, tag = 'input window, operand 1, single buffered']
    #allocation6 [shape = 's32[1]{0}', space=sflag, size = 0x4, scoped, tag = 'scoped memory for pallas_mlp.1']
    #allocation7 [shape = 'u8[32768]{0}', space=vmem, size = 0x8000, scoped, tag = 'input window, operand 3, single buffered']
    #allocation8 [shape = 'u8[32768]{0}', space=vmem, size = 0x8000, scoped, tag = 'input window, operand 5, single buffered']
    #allocation9 [shape = 's32[1]{0}', space=sflag, size = 0x4, scoped, tag = 'scoped memory for pallas_mlp.1']
    #allocation10 [shape = 'u8[4096]{0}', space=vmem, size = 0x1000, scoped, tag = 'output window, operand 0, single buffered']
    %12 = vsyncpa [#allocation3], 0
    %13 = vsyncpa [#allocation6], 0
    %14 = vsyncpa [#allocation9], 0
    %15 = vsyncpa [#allocation4], 0
    // Predicated region
    $region2: #{pallas_mlp.1} parent=1 // pred_check
      _
    $region3: #{pallas_mlp.1} parent=1 // pred_check_branch
      %17 = sbr.rel (0) target = $region5
    $region4: #{pallas_mlp.1} parent=1 // pred_region
      %s19 = ssub.s32 128, 128
      %20 = vsyncadd [#allocation3], %s19
      %s22 = sshll.u32 [#allocation2], 4
      %s23 = int_to_ptr.vmem [resolvable:$true] %s22
      %25 = dma.hbm_to_vmem [thread:$0]  %s0, 128, %s23, [#allocation3]
    $region5: #{pallas_mlp.1} parent=1 // pred_fallthru
      _
    // Predicated region
    $region6: #{pallas_mlp.1} parent=1 // pred_check
      _
    $region7: #{pallas_mlp.1} parent=1 // pred_check_branch
      %27 = sbr.rel (0) target = $region9
    $region8: #{pallas_mlp.1} parent=1 // pred_region
      %s29 = ssub.s32 256, 256
      %30 = vsyncadd [#allocation6], %s29
      %s31 = sshll.u32 [#allocation5], 4
      %s32 = int_to_ptr.vmem [resolvable:$true] %s31
      %37 = dma.hbm_to_vmem [thread:$0]  %s1, 256, %s32, [#allocation6], 64, 64, 4
    $region9: #{pallas_mlp.1} parent=1 // pred_fallthru
      _
    // Predicated region
    $region10: #{pallas_mlp.1} parent=1 // pred_check
      _
    $region11: #{pallas_mlp.1} parent=1 // pred_check_branch
      %39 = sbr.rel (0) target = $region13
    $region12: #{pallas_mlp.1} parent=1 // pred_region
      _
    $region13: #{pallas_mlp.1} parent=1 // pred_fallthru
      _
    // Predicated region
    $region14: #{pallas_mlp.1} parent=1 // pred_check
      _
    $region15: #{pallas_mlp.1} parent=1 // pred_check_branch
      %41 = sbr.rel (0) target = $region17
    $region16: #{pallas_mlp.1} parent=1 // pred_region
      %s43 = ssub.s32 1024, 1024
      %44 = vsyncadd [#allocation6], %s43
      %s45 = sshll.u32 [#allocation7], 4
      %s46 = int_to_ptr.vmem [resolvable:$true] %s45
      %51 = dma.hbm_to_vmem [thread:$0]  %s3, 1024, %s46, [#allocation6], 64, 64, 4
    $region17: #{pallas_mlp.1} parent=1 // pred_fallthru
      _
    // Predicated region
    $region18: #{pallas_mlp.1} parent=1 // pred_check
      _
    $region19: #{pallas_mlp.1} parent=1 // pred_check_branch
      %53 = sbr.rel (0) target = $region21
    $region20: #{pallas_mlp.1} parent=1 // pred_region
      _
    $region21: #{pallas_mlp.1} parent=1 // pred_fallthru
      _
    // Predicated region
    $region22: #{pallas_mlp.1} parent=1 // pred_check
      _
    $region23: #{pallas_mlp.1} parent=1 // pred_check_branch
      %55 = sbr.rel (0) target = $region25
    $region24: #{pallas_mlp.1} parent=1 // pred_region
      %s57 = ssub.s32 1024, 1024
      %58 = vsyncadd [#allocation9], %s57
      %s59 = sshll.u32 [#allocation8], 4
      %s60 = int_to_ptr.vmem [resolvable:$true] %s59
      %65 = dma.hbm_to_vmem [thread:$0]  %s5, 1024, %s60, [#allocation9], 64, 64, 4
    $region25: #{pallas_mlp.1} parent=1 // pred_fallthru
      _
    // Predicated region
    $region26: #{pallas_mlp.1} parent=1 // pred_check
      _
    $region27: #{pallas_mlp.1} parent=1 // pred_check_branch
      %67 = sbr.rel (0) target = $region29
    $region28: #{pallas_mlp.1} parent=1 // pred_region
      _
    $region29: #{pallas_mlp.1} parent=1 // pred_fallthru
      _
    // Predicated region
    $region30: #{pallas_mlp.1} parent=1 // pred_check
      _
    $region31: #{pallas_mlp.1} parent=1 // pred_check_branch
      %69 = sbr.rel (0) target = $region33
    $region32: #{pallas_mlp.1} parent=1 // pred_region
      %70 = dma.done [#allocation3], 128
    $region33: #{pallas_mlp.1} parent=1 // pred_fallthru
      _
    // Predicated region
    $region34: #{pallas_mlp.1} parent=1 // pred_check
      _
    $region35: #{pallas_mlp.1} parent=1 // pred_check_branch
      %72 = sbr.rel (0) target = $region37
    $region36: #{pallas_mlp.1} parent=1 // pred_region
      %73 = dma.done [#allocation6], 256
    $region37: #{pallas_mlp.1} parent=1 // pred_fallthru
      _
    // Predicated region
    $region38: #{pallas_mlp.1} parent=1 // pred_check
      _
    $region39: #{pallas_mlp.1} parent=1 // pred_check_branch
      %75 = sbr.rel (0) target = $region41
    $region40: #{pallas_mlp.1} parent=1 // pred_region
      %76 = dma.done [#allocation6], 1024
    $region41: #{pallas_mlp.1} parent=1 // pred_fallthru
      _
    // Predicated region
    $region42: #{pallas_mlp.1} parent=1 // pred_check
      _
    $region43: #{pallas_mlp.1} parent=1 // pred_check_branch
      %78 = sbr.rel (0) target = $region45
    $region44: #{pallas_mlp.1} parent=1 // pred_region
      %79 = dma.done [#allocation9], 1024
    $region45: #{pallas_mlp.1} parent=1 // pred_fallthru
      _
    %v81 = vld [vmem:[#allocation2] sm:$0xff]
    %v82 = vpack.c.bf16 %v81, %v81
    %v83 = vld [vmem:[#allocation5] sm:$0xf]
    %v84 = vld [vmem:[#allocation5 + $0x4] sm:$0xf]
    %v85 = vld [vmem:[#allocation5 + $0x8] sm:$0xf]
    %v86 = vld [vmem:[#allocation5 + $0xc] sm:$0xf]
    %v87 = vld [vmem:[%s2] sm:$0x1]
    %v89 = vlaneseq
    %v90 = vshrl.u32 %v89, 7
    %v91 = vsub.s32 0, %v90
    %v92 = vrot.slane %v87, %v91
    %v98 = vunpack.c.l.b16 %v83
    %v99 = vunpack.c.l.b16 %v84
    %v100 = vunpack.c.l.b16 %v85
    %v101 = vunpack.c.l.b16 %v86
    %v102 = vpack.c.b16 %v99, %v98
    %v103 = vpack.c.b16 %v101, %v100
    %vm106 = vcmask 261120
    %v108 = vsel %vm106, %v82, 0
    %110 = vmatprep.subr.bf16.mxu0 0
    %111 = vmatpush1.bf16.msra.mxu0 %v102
    %112 = vmatprep.subr.bf16.mxu0 0
    %113 = vmatpush1.bf16.msra.mxu0 %v103
    %114 = vmatprep.subr.bf16.mxu0 0
    %115 = vmatpush1.bf16.msra.mxu0 0
    %116 = vmatprep.subr.bf16.mxu0 0
    %117 = vmatpush1.bf16.msra.mxu0 0
    %118 = vmatprep.subr.bf16.mxu0 0
    %119 = vmatpush1.bf16.msra.mxu0 0
    %120 = vmatprep.subr.bf16.mxu0 0
    %121 = vmatpush1.bf16.msra.mxu0 0
    %122 = vmatprep.subr.bf16.mxu0 0
    %123 = vmatpush1.bf16.msra.mxu0 0
    %124 = vmatprep.subr.bf16.mxu0 0
    %125 = vmatpush1.bf16.msra.mxu0 0
    %126 = vmatprep.subr.bf16.mxu0 0
    %127 = vmatpush1.bf16.msra.mxu0 0
    %128 = vmatprep.subr.bf16.mxu0 0
    %129 = vmatpush1.bf16.msra.mxu0 0
    %130 = vmatprep.subr.bf16.mxu0 0
    %131 = vmatpush1.bf16.msra.mxu0 0
    %132 = vmatprep.subr.bf16.mxu0 0
    %133 = vmatpush1.bf16.msra.mxu0 0
    %134 = vmatprep.subr.bf16.mxu0 0
    %135 = vmatpush1.bf16.msra.mxu0 0
    %136 = vmatprep.subr.bf16.mxu0 0
    %137 = vmatpush1.bf16.msra.mxu0 0
    %138 = vmatprep.subr.bf16.mxu0 0
    %139 = vmatpush1.bf16.msra.mxu0 0
    %140 = vmatprep.subr.bf16.mxu0 0
    %141 = vmatpush1.bf16.msra.mxu0 0
    %142 = vmatprep.mubr.bf16.mxu0 0
    %143 = vmatmul.mubr.bf16.gmra.mrb[0].mxu0 %v108
    %v144 = vpop.f32.mrb[0].mxu0
    %v145 = vadd.f32 %v92, %v144
    %v146 = vpop.f32.mrb[0].mxu0
    %v147 = vpop.f32.mrb[0].mxu0
    %v148 = vpop.f32.mrb[0].mxu0
    %149 = vdwg.mxu0
    %v150 = vmax.f32 %v145, 0.0
    %v151 = vpack.c.bf16 %v150, %v150
    %v152 = vld [vmem:[#allocation7] sm:$0xf]
    %v153 = vld [vmem:[#allocation7 + $0x4] sm:$0xf]
    %v154 = vld [vmem:[#allocation7 + $0x8] sm:$0xf]
    %v155 = vld [vmem:[#allocation7 + $0xc] sm:$0xf]
    %v156 = vld [vmem:[#allocation7 + $0x10] sm:$0xf]
    %v157 = vld [vmem:[#allocation7 + $0x14] sm:$0xf]
    %v158 = vld [vmem:[#allocation7 + $0x18] sm:$0xf]
    %v159 = vld [vmem:[#allocation7 + $0x1c] sm:$0xf]
    %v160 = vld [vmem:[#allocation7 + $0x20] sm:$0xf]
    %v161 = vld [vmem:[#allocation7 + $0x24] sm:$0xf]
    %v162 = vld [vmem:[#allocation7 + $0x28] sm:$0xf]
    %v163 = vld [vmem:[#allocation7 + $0x2c] sm:$0xf]
    %v164 = vld [vmem:[#allocation7 + $0x30] sm:$0xf]
    %v165 = vld [vmem:[#allocation7 + $0x34] sm:$0xf]
    %v166 = vld [vmem:[#allocation7 + $0x38] sm:$0xf]
    %v167 = vld [vmem:[#allocation7 + $0x3c] sm:$0xf]
    %v168 = vld [vmem:[%s4] sm:$0x1]
    %v170 = vlaneseq
    %v171 = vshrl.u32 %v170, 7
    %v172 = vsub.s32 0, %v171
    %v173 = vrot.slane %v168, %v172
    %v191 = vunpack.c.l.b16 %v152
    %v192 = vunpack.c.l.b16 %v153
    %v193 = vunpack.c.l.b16 %v154
    %v194 = vunpack.c.l.b16 %v155
    %v195 = vunpack.c.l.b16 %v156
    %v196 = vunpack.c.l.b16 %v157
    %v197 = vunpack.c.l.b16 %v158
    %v198 = vunpack.c.l.b16 %v159
    %v199 = vunpack.c.l.b16 %v160
    %v200 = vunpack.c.l.b16 %v161
    %v201 = vunpack.c.l.b16 %v162
    %v202 = vunpack.c.l.b16 %v163
    %v203 = vunpack.c.l.b16 %v164
    %v204 = vunpack.c.l.b16 %v165
    %v205 = vunpack.c.l.b16 %v166
    %v206 = vunpack.c.l.b16 %v167
    %v207 = vpack.c.b16 %v192, %v191
    %v208 = vpack.c.b16 %v194, %v193
    %v209 = vpack.c.b16 %v196, %v195
    %v210 = vpack.c.b16 %v198, %v197
    %v211 = vpack.c.b16 %v200, %v199
    %v212 = vpack.c.b16 %v202, %v201
    %v213 = vpack.c.b16 %v204, %v203
    %v214 = vpack.c.b16 %v206, %v205
    %223 = vmatprep.subr.bf16.mxu0 0
    %224 = vmatpush1.bf16.msra.mxu0 %v207
    %225 = vmatprep.subr.bf16.mxu0 0
    %226 = vmatpush1.bf16.msra.mxu0 %v208
    %227 = vmatprep.subr.bf16.mxu0 0
    %228 = vmatpush1.bf16.msra.mxu0 %v209
    %229 = vmatprep.subr.bf16.mxu0 0
    %230 = vmatpush1.bf16.msra.mxu0 %v210
    %231 = vmatprep.subr.bf16.mxu0 0
    %232 = vmatpush1.bf16.msra.mxu0 %v211
    %233 = vmatprep.subr.bf16.mxu0 0
    %234 = vmatpush1.bf16.msra.mxu0 %v212
    %235 = vmatprep.subr.bf16.mxu0 0
    %236 = vmatpush1.bf16.msra.mxu0 %v213
    %237 = vmatprep.subr.bf16.mxu0 0
    %238 = vmatpush1.bf16.msra.mxu0 %v214
    %239 = vmatprep.subr.bf16.mxu0 0
    %240 = vmatpush1.bf16.msra.mxu0 0
    %241 = vmatprep.subr.bf16.mxu0 0
    %242 = vmatpush1.bf16.msra.mxu0 0
    %243 = vmatprep.subr.bf16.mxu0 0
    %244 = vmatpush1.bf16.msra.mxu0 0
    %245 = vmatprep.subr.bf16.mxu0 0
    %246 = vmatpush1.bf16.msra.mxu0 0
    %247 = vmatprep.subr.bf16.mxu0 0
    %248 = vmatpush1.bf16.msra.mxu0 0
    %249 = vmatprep.subr.bf16.mxu0 0
    %250 = vmatpush1.bf16.msra.mxu0 0
    %251 = vmatprep.subr.bf16.mxu0 0
    %252 = vmatpush1.bf16.msra.mxu0 0
    %253 = vmatprep.subr.bf16.mxu0 0
    %254 = vmatpush1.bf16.msra.mxu0 0
    %255 = vmatprep.mubr.bf16.mxu0 0
    %256 = vmatmul.mubr.bf16.gmra.mrb[0].mxu0 %v151
    %v257 = vpop.f32.mrb[0].mxu0
    %v258 = vadd.f32 %v173, %v257
    %v259 = vpop.f32.mrb[0].mxu0
    %v260 = vpop.f32.mrb[0].mxu0
    %v261 = vpop.f32.mrb[0].mxu0
    %262 = vdwg.mxu0
    %v263 = vmax.f32 %v258, 0.0
    %v264 = vpack.c.bf16 %v263, %v263
    %v265 = vld [vmem:[#allocation8] sm:$0xf]
    %v266 = vld [vmem:[#allocation8 + $0x4] sm:$0xf]
    %v267 = vld [vmem:[#allocation8 + $0x8] sm:$0xf]
    %v268 = vld [vmem:[#allocation8 + $0xc] sm:$0xf]
    %v269 = vld [vmem:[#allocation8 + $0x10] sm:$0xf]
    %v270 = vld [vmem:[#allocation8 + $0x14] sm:$0xf]
    %v271 = vld [vmem:[#allocation8 + $0x18] sm:$0xf]
    %v272 = vld [vmem:[#allocation8 + $0x1c] sm:$0xf]
    %v273 = vld [vmem:[#allocation8 + $0x20] sm:$0xf]
    %v274 = vld [vmem:[#allocation8 + $0x24] sm:$0xf]
    %v275 = vld [vmem:[#allocation8 + $0x28] sm:$0xf]
    %v276 = vld [vmem:[#allocation8 + $0x2c] sm:$0xf]
    %v277 = vld [vmem:[#allocation8 + $0x30] sm:$0xf]
    %v278 = vld [vmem:[#allocation8 + $0x34] sm:$0xf]
    %v279 = vld [vmem:[#allocation8 + $0x38] sm:$0xf]
    %v280 = vld [vmem:[#allocation8 + $0x3c] sm:$0xf]
    %v281 = vld [vmem:[%s6] sm:$0x1]
    %v283 = vlaneseq
    %v284 = vshrl.u32 %v283, 7
    %v285 = vsub.s32 0, %v284
    %v286 = vrot.slane %v281, %v285
    %v304 = vunpack.c.l.b16 %v265
    %v305 = vunpack.c.l.b16 %v266
    %v306 = vunpack.c.l.b16 %v267
    %v307 = vunpack.c.l.b16 %v268
    %v308 = vunpack.c.l.b16 %v269
    %v309 = vunpack.c.l.b16 %v270
    %v310 = vunpack.c.l.b16 %v271
    %v311 = vunpack.c.l.b16 %v272
    %v312 = vunpack.c.l.b16 %v273
    %v313 = vunpack.c.l.b16 %v274
    %v314 = vunpack.c.l.b16 %v275
    %v315 = vunpack.c.l.b16 %v276
    %v316 = vunpack.c.l.b16 %v277
    %v317 = vunpack.c.l.b16 %v278
    %v318 = vunpack.c.l.b16 %v279
    %v319 = vunpack.c.l.b16 %v280
    %v320 = vpack.c.b16 %v305, %v304
    %v321 = vpack.c.b16 %v307, %v306
    %v322 = vpack.c.b16 %v309, %v308
    %v323 = vpack.c.b16 %v311, %v310
    %v324 = vpack.c.b16 %v313, %v312
    %v325 = vpack.c.b16 %v315, %v314
    %v326 = vpack.c.b16 %v317, %v316
    %v327 = vpack.c.b16 %v319, %v318
    %336 = vmatprep.subr.bf16.mxu0 0
    %337 = vmatpush1.bf16.msra.mxu0 %v320
    %338 = vmatprep.subr.bf16.mxu0 0
    %339 = vmatpush1.bf16.msra.mxu0 %v321
    %340 = vmatprep.subr.bf16.mxu0 0
    %341 = vmatpush1.bf16.msra.mxu0 %v322
    %342 = vmatprep.subr.bf16.mxu0 0
    %343 = vmatpush1.bf16.msra.mxu0 %v323
    %344 = vmatprep.subr.bf16.mxu0 0
    %345 = vmatpush1.bf16.msra.mxu0 %v324
    %346 = vmatprep.subr.bf16.mxu0 0
    %347 = vmatpush1.bf16.msra.mxu0 %v325
    %348 = vmatprep.subr.bf16.mxu0 0
    %349 = vmatpush1.bf16.msra.mxu0 %v326
    %350 = vmatprep.subr.bf16.mxu0 0
    %351 = vmatpush1.bf16.msra.mxu0 %v327
    %352 = vmatprep.subr.bf16.mxu0 0
    %353 = vmatpush1.bf16.msra.mxu0 0
    %354 = vmatprep.subr.bf16.mxu0 0
    %355 = vmatpush1.bf16.msra.mxu0 0
    %356 = vmatprep.subr.bf16.mxu0 0
    %357 = vmatpush1.bf16.msra.mxu0 0
    %358 = vmatprep.subr.bf16.mxu0 0
    %359 = vmatpush1.bf16.msra.mxu0 0
    %360 = vmatprep.subr.bf16.mxu0 0
    %361 = vmatpush1.bf16.msra.mxu0 0
    %362 = vmatprep.subr.bf16.mxu0 0
    %363 = vmatpush1.bf16.msra.mxu0 0
    %364 = vmatprep.subr.bf16.mxu0 0
    %365 = vmatpush1.bf16.msra.mxu0 0
    %366 = vmatprep.subr.bf16.mxu0 0
    %367 = vmatpush1.bf16.msra.mxu0 0
    %368 = vmatprep.mubr.bf16.mxu0 0
    %369 = vmatmul.mubr.bf16.gmra.mrb[0].mxu0 %v264
    %v370 = vpop.f32.mrb[0].mxu0
    %v371 = vadd.f32 %v286, %v370
    %v372 = vpop.f32.mrb[0].mxu0
    %v373 = vpop.f32.mrb[0].mxu0
    %v374 = vpop.f32.mrb[0].mxu0
    %375 = vdwg.mxu0
    %376 = vst [vmem:[#allocation10] sm:$0xff] %v371
    // Predicated region
    $region46: #{pallas_mlp.1} parent=1 // pred_check
      _
    $region47: #{pallas_mlp.1} parent=1 // pred_check_branch
      %378 = sbr.rel (0) target = $region49
    $region48: #{pallas_mlp.1} parent=1 // pred_region
      %s380 = ssub.s32 128, 128
      %381 = vsyncadd [#allocation4], %s380
      %s383 = sshll.u32 [#allocation10], 4
      %s384 = int_to_ptr.vmem [resolvable:$true] %s383
      %386 = dma.vmem_to_hbm [thread:$0]  %s384, 128, %s7, [#allocation4]
    $region49: #{pallas_mlp.1} parent=1 // pred_fallthru
      _
    // Predicated region
    $region50: #{pallas_mlp.1} parent=1 // pred_check
      _
    $region51: #{pallas_mlp.1} parent=1 // pred_check_branch
      %388 = sbr.rel (0) target = $region53
    $region52: #{pallas_mlp.1} parent=1 // pred_region
      %389 = dma.done [#allocation4], 128
    $region53: #{pallas_mlp.1} parent=1 // pred_fallthru
      _
    %390 = vsyncpa [#allocation3], 1
    %391 = vsyncpa [#allocation6], 1
    %392 = vsyncpa [#allocation9], 1
    %393 = vsyncpa [#allocation4], 1

</llo_original>
